<compile_context>
chip_gen: v7x
topology: tpu7x:2x2x1
jax: 0.10.0
libtpu: 0.0.40
codegen_flags: <defaults>
</compile_context>

<pallas_src>
import functools

import jax
import jax.numpy as jnp
from jax import lax
from jax.experimental import pallas as pl
from jax.experimental.pallas import tpu as pltpu

ESP = 1e-8
GAMMA = 2.0                 # the module fixes gamma = 2.0
_SQRT_ESP = ESP ** 0.5


def _focal_fidelity_kernel(logits_ref, labels_ref, out_ref, acc_ref, *, n_total):
    j = pl.program_id(1)                          # batch-tile (reduction) axis
    inner = pl.num_programs(1)

    @pl.when(j == 0)
    def _init():
        acc_ref[...] = jnp.zeros_like(acc_ref)

    x = logits_ref[...].astype(jnp.float32)       # (C, TN) lane-dense, cast in-kernel
    g = labels_ref[...]                           # (1, TN) int32
    c, tn = x.shape

    # Numerically stable softmax pieces; the class axis sits on sublanes, so
    # these are short sublane reductions and all row-scalars are (1, TN).
    m = jnp.max(x, axis=0, keepdims=True)         # (1, TN)
    e = jnp.exp(x - m)                            # (C, TN) — only wide EUP pass
    denom = jnp.sum(e, axis=0, keepdims=True)     # (1, TN)

    class_ids = lax.broadcasted_iota(jnp.int32, x.shape, 0)
    e_g = jnp.sum(jnp.where(class_ids == g, e, 0.0),
                  axis=0, keepdims=True)          # (1, TN)

    p_g = e_g / denom                             # (1, TN)

    # sum_c sqrt(pm * onehot + esp) == sqrt(p_g + esp) + (C - 1) * sqrt(esp)
    loss = 1.0 - (jnp.sqrt(p_g + ESP) + (c - 1) * _SQRT_ESP)

    one_minus = 1.0 - p_g
    f_loss = one_minus * one_minus * loss         # gamma == 2.0

    row_start = (pl.program_id(0) * inner + j) * tn

    @pl.when(row_start + tn <= n_total)           # fully valid tile: no mask work
    def _full_tile():
        acc_ref[...] += f_loss

    @pl.when(row_start + tn > n_total)            # tile contains padded rows
    def _ragged_tile():
        col = lax.broadcasted_iota(jnp.int32, (1, tn), 1)
        valid = ((row_start + col) < n_total).astype(jnp.float32)
        acc_ref[...] += f_loss * valid

    @pl.when(j == inner - 1)
    def _finalize():
        # single cross-lane reduce per core; partial already divided by N so
        # the wrapper just sums the per-core partials.
        total = jnp.sum(acc_ref[...], keepdims=True)          # (1, 1)
        out_ref[...] = (total / float(n_total)).reshape(1, 1, 1)


def _round_up(x, m):
    return ((x + m - 1) // m) * m


def _num_tensorcores():
    """TensorCores one Pallas launch can span: 2 on megacore parts, else 1."""
    try:
        kind = jax.devices()[0].device_kind.lower()
    except Exception:
        return 1
    if "v4" in kind or "v7" in kind or "v5p" in kind or kind.strip() == "tpu v5":
        return 2                                   # megacore: 2 TCs per device
    return 1                                       # v5e / v6e / unknown


def _pick_tile(rows_per_core, num_classes, in_itemsize, vmem_budget_bytes,
               max_tile_n):
    """Largest batch-tile (multiple of 128 lanes) that fits the VMEM budget.

    Per 128 rows of a tile (classes padded to a sublane multiple):
      * 2 double-buffered logits buffers     2 * C_pad * itemsize * 128
      * f32 cast / exp / where temporaries   3 * C_pad * 4        * 128
      * 2 double-buffered label buffers      2 * 32               * 128
      * the (1, tn) f32 accumulator          32                   * 128
    """
    c_pad = _round_up(num_classes, 8)
    per_128_rows = 128 * (2 * c_pad * in_itemsize + 3 * c_pad * 4 + 2 * 32 + 32)
    max_fit = max(1, vmem_budget_bytes // per_128_rows) * 128
    tn = min(max_fit, max_tile_n, _round_up(rows_per_core, 128))
    return max(128, tn)


def categorical_focal_loss_fidelity(p, g, num_classes, *,
                                    max_tile_n=32768,
                                    vmem_budget_bytes=10 * 1024 * 1024,
                                    num_cores=None):
    """p: (N, num_classes) float logits (any float dtype); g: integer labels."""
    N, C = p.shape
    assert C == num_classes

    if num_cores is None:
        num_cores = _num_tensorcores()

    labels = jnp.asarray(g).reshape(-1).astype(jnp.int32)
    assert labels.shape[0] == N

    per_core = -(-N // num_cores)                            # ceil
    tn = _pick_tile(per_core, C, jnp.dtype(p.dtype).itemsize,
                    vmem_budget_bytes, max_tile_n)
    inner = -(-per_core // tn)                               # ceil
    n_pad = num_cores * inner * tn

    # Lane-dense layout: batch on the 128-lane axis.  One extra XLA transpose
    # pass over the logits, but every vreg in the kernel is then fully dense
    # (kernel was compute-slot-bound ~10x above its HBM floor before).
    pt = jnp.transpose(p)                                    # (C, N), native dtype
    if n_pad != N:
        pad = n_pad - N
        pt = jnp.pad(pt, ((0, 0), (0, pad)))
        labels = jnp.pad(labels, (0, pad))
    labels2d = labels.reshape(1, n_pad)

    kernel = functools.partial(_focal_fidelity_kernel, n_total=N)

    out = pl.pallas_call(
        kernel,
        out_shape=jax.ShapeDtypeStruct((num_cores, 1, 1), jnp.float32),
        grid_spec=pltpu.PrefetchScalarGridSpec(
            num_scalar_prefetch=0,
            grid=(num_cores, inner),
            in_specs=[
                pl.BlockSpec((C, tn), lambda cix, j: (0, cix * inner + j)),
                pl.BlockSpec((1, tn), lambda cix, j: (0, cix * inner + j)),
            ],
            out_specs=pl.BlockSpec((1, 1, 1), lambda cix, j: (cix, 0, 0)),
            scratch_shapes=[pltpu.VMEM((1, tn), jnp.float32)],
        ),
        compiler_params=pltpu.CompilerParams(
            # batch halves shard across TensorCores on megacore parts; the
            # inner axis is a sequential reduction over batch tiles.
            dimension_semantics=("parallel", "arbitrary"),
            # explicit scoped-VMEM limit; tile picker budgets well below this
            # (safe on v5e 16 MiB default, v6e/v7x 32 MiB, v7x 64 MiB physical).
            vmem_limit_bytes=32 * 1024 * 1024,
        ),
    )(pt, labels2d)                     # native-dtype logits; cast is in-kernel
    return jnp.sum(out)


def _reference(p, g, num_classes):
    """Pure-JAX replica of the PyTorch forward for verification."""
    g = g.reshape(-1)
    pm = jax.nn.softmax(p.astype(jnp.float32), axis=1)
    onehot = jax.nn.one_hot(g, num_classes, dtype=jnp.float32)
    loss = 1.0 - jnp.sum(jnp.sqrt(pm * onehot + ESP), axis=1)
    p_max = pm[jnp.arange(g.shape[0]), g]
    f_loss = (1.0 - p_max) ** GAMMA * loss
    return jnp.mean(f_loss)


if __name__ == "__main__":
    key = jax.random.PRNGKey(0)
    k1, k2 = jax.random.split(key)

    # Small demo; N is deliberately not a multiple of the tiling so the
    # in-kernel pad mask and multi-step accumulation are both exercised
    # (max_tile_n=512 forces several reduction steps per core).
    N, num_classes = 2000, 10
    logits = jax.random.normal(k1, (N, num_classes), dtype=jnp.float32)
    labels = jax.random.randint(k2, (N,), 0, num_classes, dtype=jnp.int32)

    out = categorical_focal_loss_fidelity(logits, labels, num_classes,
                                          max_tile_n=512)
    out = jax.block_until_ready(out)

    ref = _reference(logits, labels, num_classes)
    assert jnp.allclose(out, ref, rtol=1e-5, atol=1e-5), (out, ref)

    print("KERNEL_OK")
</pallas_src>

<mosaic_0001>
module attributes {stable_mosaic.version = 11 : i64} {
  func.func @_focal_fidelity_kernel(%arg0: i32, %arg1: i32, %arg2: memref<10x512xf32, #tpu.memory_space<vmem>>, %arg3: memref<1x512xi32, #tpu.memory_space<vmem>>, %arg4: memref<1x1x1xf32, #tpu.memory_space<vmem>>, %arg5: memref<1x512xf32, #tpu.memory_space<vmem>>) attributes {dimension_semantics = [#tpu.dimension_semantics<parallel>, #tpu.dimension_semantics<arbitrary>], iteration_bounds = array<i64: 1, 4>, scalar_prefetch = 0 : i64, scratch_operands = 1 : i64, tpu.core_type = #tpu.core_type<tc>, window_params = [{transform_indices = @transform_0, window_bounds = array<i64: 10, 512>}, {transform_indices = @transform_1, window_bounds = array<i64: 1, 512>}, {transform_indices = @transform_2, window_bounds = array<i64: 1, 1, 1>}]} {
    %c0_i32 = arith.constant 0 : i32
    %0 = arith.cmpi eq, %arg1, %c0_i32 : i32
    %1 = arith.extui %0 : i1 to i32
    %c0_i32_0 = arith.constant 0 : i32
    %2 = arith.cmpi ne, %1, %c0_i32_0 : i32
    scf.if %2 {
      %cst_17 = arith.constant 0.000000e+00 : f32
      %45 = vector.broadcast %cst_17 : f32 to vector<1x512xf32>
      %c0_18 = arith.constant 0 : index
      %c0_19 = arith.constant 0 : index
      %46 = vector.load %arg5[%c0_18, %c0_19] : memref<1x512xf32, #tpu.memory_space<vmem>>, vector<1x512xf32>
      tpu.vector_store %arg5[%c0_18, %c0_19], %45 {strides = array<i32>} : memref<1x512xf32, #tpu.memory_space<vmem>>, vector<1x512xf32>,
    } else {
    }
    %c0 = arith.constant 0 : index
    %c0_1 = arith.constant 0 : index
    %3 = vector.load %arg2[%c0, %c0_1] : memref<10x512xf32, #tpu.memory_space<vmem>>, vector<10x512xf32>
    %c0_2 = arith.constant 0 : index
    %c0_3 = arith.constant 0 : index
    %4 = vector.load %arg3[%c0_2, %c0_3] : memref<1x512xi32, #tpu.memory_space<vmem>>, vector<1x512xi32>
    %cst = arith.constant dense<0xFF800000> : vector<512xf32>
    %5 = vector.multi_reduction <maximumf>, %3, %cst [0] : vector<10x512xf32> to vector<512xf32>
    %6 = vector.shape_cast %5 : vector<512xf32> to vector<1x512xf32>
    %7 = vector.broadcast %6 : vector<1x512xf32> to vector<10x512xf32>
    %8 = arith.subf %3, %7 : vector<10x512xf32>
    %9 = math.exp %8 : vector<10x512xf32>
    %cst_4 = arith.constant dense<0.000000e+00> : vector<512xf32>
    %10 = vector.multi_reduction <add>, %9, %cst_4 [0] : vector<10x512xf32> to vector<512xf32>
    %11 = vector.shape_cast %10 : vector<512xf32> to vector<1x512xf32>
    %12 = tpu.iota {dimensions = array<i32: 0>} : vector<10x512xi32>
    %13 = vector.broadcast %4 : vector<1x512xi32> to vector<10x512xi32>
    %14 = arith.cmpi eq, %12, %13 : vector<10x512xi32>
    %cst_5 = arith.constant 0.000000e+00 : f32
    %15 = vector.broadcast %cst_5 : f32 to vector<10x512xf32>
    %16 = arith.select %14, %9, %15 : vector<10x512xi1>, vector<10x512xf32>
    %cst_6 = arith.constant dense<0.000000e+00> : vector<512xf32>
    %17 = vector.multi_reduction <add>, %16, %cst_6 [0] : vector<10x512xf32> to vector<512xf32>
    %18 = vector.shape_cast %17 : vector<512xf32> to vector<1x512xf32>
    %19 = arith.divf %18, %11 : vector<1x512xf32>
    %cst_7 = arith.constant 9.99999993E-9 : f32
    %20 = vector.broadcast %cst_7 : f32 to vector<1x512xf32>
    %21 = arith.addf %19, %20 : vector<1x512xf32>
    %22 = math.sqrt %21 : vector<1x512xf32>
    %cst_8 = arith.constant 8.99999984E-4 : f32
    %23 = vector.broadcast %cst_8 : f32 to vector<1x512xf32>
    %24 = arith.addf %22, %23 : vector<1x512xf32>
    %cst_9 = arith.constant 1.000000e+00 : f32
    %25 = vector.broadcast %cst_9 : f32 to vector<1x512xf32>
    %26 = arith.subf %25, %24 : vector<1x512xf32>
    %cst_10 = arith.constant 1.000000e+00 : f32
    %27 = vector.broadcast %cst_10 : f32 to vector<1x512xf32>
    %28 = arith.subf %27, %19 : vector<1x512xf32>
    %29 = arith.mulf %28, %28 : vector<1x512xf32>
    %30 = arith.mulf %29, %26 : vector<1x512xf32>
    %c4_i32 = arith.constant 4 : i32
    %31 = arith.muli %arg0, %c4_i32 : i32
    %32 = arith.addi %31, %arg1 : i32
    %c512_i32 = arith.constant 512 : i32
    %33 = arith.muli %32, %c512_i32 : i32
    %c512_i32_11 = arith.constant 512 : i32
    %34 = arith.addi %33, %c512_i32_11 : i32
    %c2000_i32 = arith.constant 2000 : i32
    %35 = arith.cmpi sle, %34, %c2000_i32 : i32
    %36 = arith.extui %35 : i1 to i32
    %c0_i32_12 = arith.constant 0 : i32
    %37 = arith.cmpi ne, %36, %c0_i32_12 : i32
    scf.if %37 {
      %c0_17 = arith.constant 0 : index
      %c0_18 = arith.constant 0 : index
      %45 = vector.load %arg5[%c0_17, %c0_18] : memref<1x512xf32, #tpu.memory_space<vmem>>, vector<1x512xf32>
      %46 = arith.addf %45, %30 : vector<1x512xf32>
      %c0_19 = arith.constant 0 : index
      %c0_20 = arith.constant 0 : index
      %47 = vector.load %arg5[%c0_19, %c0_20] : memref<1x512xf32, #tpu.memory_space<vmem>>, vector<1x512xf32>
      tpu.vector_store %arg5[%c0_19, %c0_20], %46 {strides = array<i32>} : memref<1x512xf32, #tpu.memory_space<vmem>>, vector<1x512xf32>,
    } else {
    }
    %c512_i32_13 = arith.constant 512 : i32
    %38 = arith.addi %33, %c512_i32_13 : i32
    %c2000_i32_14 = arith.constant 2000 : i32
    %39 = arith.cmpi sgt, %38, %c2000_i32_14 : i32
    %40 = arith.extui %39 : i1 to i32
    %c0_i32_15 = arith.constant 0 : i32
    %41 = arith.cmpi ne, %40, %c0_i32_15 : i32
    scf.if %41 {
      %45 = tpu.iota {dimensions = array<i32: 1>} : vector<1x512xi32>
      %46 = vector.broadcast %33 : i32 to vector<1x512xi32>
      %47 = arith.addi %46, %45 : vector<1x512xi32>
      %c2000_i32_17 = arith.constant 2000 : i32
      %48 = vector.broadcast %c2000_i32_17 : i32 to vector<1x512xi32>
      %49 = arith.cmpi slt, %47, %48 : vector<1x512xi32>
      %50 = arith.extui %49 : vector<1x512xi1> to vector<1x512xi32>
      %51 = arith.sitofp %50 : vector<1x512xi32> to vector<1x512xf32>
      %c0_18 = arith.constant 0 : index
      %c0_19 = arith.constant 0 : index
      %52 = vector.load %arg5[%c0_18, %c0_19] : memref<1x512xf32, #tpu.memory_space<vmem>>, vector<1x512xf32>
      %53 = arith.mulf %30, %51 : vector<1x512xf32>
      %54 = arith.addf %52, %53 : vector<1x512xf32>
      %c0_20 = arith.constant 0 : index
      %c0_21 = arith.constant 0 : index
      %55 = vector.load %arg5[%c0_20, %c0_21] : memref<1x512xf32, #tpu.memory_space<vmem>>, vector<1x512xf32>
      tpu.vector_store %arg5[%c0_20, %c0_21], %54 {strides = array<i32>} : memref<1x512xf32, #tpu.memory_space<vmem>>, vector<1x512xf32>,
    } else {
    }
    %c3_i32 = arith.constant 3 : i32
    %42 = arith.cmpi eq, %arg1, %c3_i32 : i32
    %43 = arith.extui %42 : i1 to i32
    %c0_i32_16 = arith.constant 0 : i32
    %44 = arith.cmpi ne, %43, %c0_i32_16 : i32
    scf.if %44 {
      %c0_17 = arith.constant 0 : index
      %c0_18 = arith.constant 0 : index
      %45 = vector.load %arg5[%c0_17, %c0_18] : memref<1x512xf32, #tpu.memory_space<vmem>>, vector<1x512xf32>
      %46 = vector.shape_cast %45 : vector<1x512xf32> to vector<1x1x512xf32>
      %cst_19 = arith.constant dense<0.000000e+00> : vector<1xf32>
      %47 = vector.multi_reduction <add>, %46, %cst_19 [1, 2] : vector<1x1x512xf32> to vector<1xf32>
      %48 = vector.shape_cast %47 : vector<1xf32> to vector<1x1x1xf32>
      %49 = vector.extract %48[0, 0, 0] : f32 from vector<1x1x1xf32>
      %50 = vector.broadcast %49 : f32 to vector<1x1xf32>
      %cst_20 = arith.constant 2.000000e+03 : f32
      %51 = vector.broadcast %cst_20 : f32 to vector<1x1xf32>
      %52 = arith.divf %50, %51 : vector<1x1xf32>
      %53 = vector.shape_cast %52 : vector<1x1xf32> to vector<1x1x1xf32>
      %c0_21 = arith.constant 0 : index
      %c0_22 = arith.constant 0 : index
      %c0_23 = arith.constant 0 : index
      %54 = vector.load %arg4[%c0_21, %c0_22, %c0_23] : memref<1x1x1xf32, #tpu.memory_space<vmem>>, vector<1x1x1xf32>
      tpu.vector_store %arg4[%c0_21, %c0_22, %c0_23], %53 {strides = array<i32>} : memref<1x1x1xf32, #tpu.memory_space<vmem>>, vector<1x1x1xf32>,
    } else {
    }
    return
  }
  func.func @transform_0(%arg0: i32, %arg1: i32) -> (i32, i32) {
    %c4_i32 = arith.constant 4 : i32
    %0 = arith.muli %arg0, %c4_i32 : i32
    %1 = arith.addi %0, %arg1 : i32
    %c0_i32 = arith.constant 0 : i32
    %c0_i32_0 = arith.constant 0 : i32
    return %c0_i32, %1 : i32, i32
  }
  func.func @transform_1(%arg0: i32, %arg1: i32) -> (i32, i32) {
    %c4_i32 = arith.constant 4 : i32
    %0 = arith.muli %arg0, %c4_i32 : i32
    %1 = arith.addi %0, %arg1 : i32
    %c0_i32 = arith.constant 0 : i32
    %c0_i32_0 = arith.constant 0 : i32
    return %c0_i32, %1 : i32, i32
  }
  func.func @transform_2(%arg0: i32, %arg1: i32) -> (i32, i32, i32) {
    %c0_i32 = arith.constant 0 : i32
    %c0_i32_0 = arith.constant 0 : i32
    %c0_i32_1 = arith.constant 0 : i32
    return %arg0, %c0_i32, %c0_i32_0 : i32, i32, i32
  }
}

</mosaic_0001>

<llo_original>
// kernel: tpu_custom_call.1
$region0: #{tpu_custom_call.1}
  #allocation0 [shape = 'u32[]', space=smem, size = 0x4, offset = 0x4, fixed_abs, tag = 'smem constant byte address 0x4 - core index']
  #allocation1 [shape = 'u32[144,128]{1,0:T(1,128)}', space=vmem, size = 0x12000, scoped, tag = 'internal scratch']
  #allocation2 [shape = 'f32[1,512]{1,0:T(1,128)}', space=vmem, size = 0x800, scoped, tag = 'scratch operand']
  %s0 = inlined_call_operand.hbm [shape: f32[10,2048], index: 0, kind: input, shape index: {}]
  %s1 = inlined_call_operand.hbm [shape: s32[1,2048], index: 1, kind: input, shape index: {}]
  %s2 = inlined_call_operand.hbm [shape: f32[1,1,1], index: 2, kind: output, shape index: {}]
  %s3 = sld [smem:[#allocation0]]
  $region65: #{tpu_custom_call.1} parent=0
    _
  %s5 = ssub.s32 1, %s3
  %s6 = scalar_select 0, %s5, %s3
  $region1: #{tpu_custom_call.1} parent=0
    #allocation3 [shape = 'u8[65536]{0}', space=vmem, size = 0x10000, scoped, tag = 'input window, operand 0']
    #allocation4 [shape = 's32[2]{0}', space=sflag, size = 0x8, scoped, tag = 'scoped memory for tpu_custom_call.1']
    #allocation5 [shape = 's32[2]{0}', space=sflag, size = 0x8, scoped, tag = 'scoped memory for tpu_custom_call.1']
    #allocation6 [shape = 'u8[4096]{0}', space=vmem, size = 0x1000, scoped, tag = 'input window, operand 1']
    #allocation7 [shape = 's32[2]{0}', space=sflag, size = 0x8, scoped, tag = 'scoped memory for tpu_custom_call.1']
    #allocation8 [shape = 'u8[512]{0}', space=vmem, size = 0x400, scoped, tag = 'output window, operand 0, single buffered']
    %7 = vsyncpa [#allocation4], 0
    %s8 = scalar_lea.sflag [#allocation4], 1
    %9 = vsyncpa %s8, 0
    %10 = vsyncpa [#allocation7], 0
    %s11 = scalar_lea.sflag [#allocation7], 1
    %12 = vsyncpa %s11, 0
    %13 = vsyncpa [#allocation5], 0
    loop: start=0, step=1, limit=6
    $region2: #{tpu_custom_call.1} parent=1 // loop_pre_header
      _
    $region3: #{tpu_custom_call.1} parent=1 // loop_header
      %s15 = sphi 0, %s19
      %p16 = scmp.ge.s32.totalorder %s15, 6
      %s22 = sphi 0, %s34
      %s23 = sphi 0, %s30
      %s24 = sphi 0, %s22
      %s25 = sphi 0, %s23
      %s26 = sphi 0, %s24
      %s27 = sphi 0, %s25
      %s41 = sphi 0, %s43
      %s44 = sphi 0, %s41
      %s45 = sphi 0, %s44
      %s61 = sphi 0, %s45
      %s71 = sphi 0, %s73
      %s74 = sphi 0, %s71
      %s75 = sphi 0, %s74
      %s91 = sphi 0, %s75
      %s97 = sphi 0, %s99
      %s100 = sphi 0, %s97
      %s101 = sphi 0, %s100
      %s117 = sphi 0, %s101
    $region4: #{tpu_custom_call.1} parent=1 // loop_header_branch
      %18 = sbr.rel (%p16) target = $region8
    $region5: #{tpu_custom_call.1} parent=1 // loop_body
      %s20 = ssub.s32 %s15, 1
      %s21 = ssub.s32 %s15, 2
      %s28 = sadd.s32 1, %s23
      %p29 = scmp.ge.s32.totalorder %s28, 4
      %s30 = scalar_select %p29, 0, %s28
      %s31 = sadd.s32 1, %s22
      %s32 = scalar_select %p29, %s31, %s22
      %p33 = scmp.ge.s32.totalorder %s32, 1
      %s34 = scalar_select %p33, 0, %s32
      %s35 = smul.u32 %s22, 4
      %s36 = sadd.s32 %s35, %s23
      %s37 = smul.u32 %s34, 4
      %s38 = sadd.s32 %s37, %s30
      %s39 = ssub.s32 %s36, %s38
      %p40 = scmp.eq.s32.totalorder %s39, 0
      %s42 = sadd.s32 %s41, 1
      %s43 = scalar_select %p40, %s41, %s42
      %p46 = pneg %p40
      %p47 = scmp.eq.s32.totalorder %s15, 3
      %p48 = por %p46, %p47
      %p49 = scmp.ne.s32.totalorder %s41, %s44
      %p50 = scmp.eq.s32.totalorder %s15, 0
      %p51 = por %p49, %p50
      %p52 = scmp.ne.s32.totalorder %s41, %s44
      %p53 = scmp.eq.s32.totalorder %s20, 3
      %p54 = por %p52, %p53
      %p55 = scmp.ne.s32.totalorder %s44, %s45
      %p56 = scmp.eq.s32.totalorder %s20, 0
      %p57 = por %p55, %p56
      %p58 = scmp.ne.s32.totalorder %s44, %s45
      %p59 = scmp.eq.s32.totalorder %s21, 3
      %p60 = por %p58, %p59
      %p62 = scmp.ne.s32.totalorder %s45, %s61
      %p63 = scmp.eq.s32.totalorder %s21, 0
      %p64 = por %p62, %p63
      %s65 = smul.u32 %s22, 4
      %s66 = sadd.s32 %s65, %s23
      %s67 = smul.u32 %s34, 4
      %s68 = sadd.s32 %s67, %s30
      %s69 = ssub.s32 %s66, %s68
      %p70 = scmp.eq.s32.totalorder %s69, 0
      %s72 = sadd.s32 %s71, 1
      %s73 = scalar_select %p70, %s71, %s72
      %p76 = pneg %p70
      %p77 = scmp.eq.s32.totalorder %s15, 3
      %p78 = por %p76, %p77
      %p79 = scmp.ne.s32.totalorder %s71, %s74
      %p80 = scmp.eq.s32.totalorder %s15, 0
      %p81 = por %p79, %p80
      %p82 = scmp.ne.s32.totalorder %s71, %s74
      %p83 = scmp.eq.s32.totalorder %s20, 3
      %p84 = por %p82, %p83
      %p85 = scmp.ne.s32.totalorder %s74, %s75
      %p86 = scmp.eq.s32.totalorder %s20, 0
      %p87 = por %p85, %p86
      %p88 = scmp.ne.s32.totalorder %s74, %s75
      %p89 = scmp.eq.s32.totalorder %s21, 3
      %p90 = por %p88, %p89
      %p92 = scmp.ne.s32.totalorder %s75, %s91
      %p93 = scmp.eq.s32.totalorder %s21, 0
      %p94 = por %p92, %p93
      %s95 = ssub.s32 %s22, %s34
      %p96 = scmp.eq.s32.totalorder %s95, 0
      %s98 = sadd.s32 %s97, 1
      %s99 = scalar_select %p96, %s97, %s98
      %p102 = pneg %p96
      %p103 = scmp.eq.s32.totalorder %s15, 3
      %p104 = por %p102, %p103
      %p105 = scmp.ne.s32.totalorder %s97, %s100
      %p106 = scmp.eq.s32.totalorder %s15, 0
      %p107 = por %p105, %p106
      %p108 = scmp.ne.s32.totalorder %s97, %s100
      %p109 = scmp.eq.s32.totalorder %s20, 3
      %p110 = por %p108, %p109
      %p111 = scmp.ne.s32.totalorder %s100, %s101
      %p112 = scmp.eq.s32.totalorder %s20, 0
      %p113 = por %p111, %p112
      %p114 = scmp.ne.s32.totalorder %s100, %s101
      %p115 = scmp.eq.s32.totalorder %s21, 3
      %p116 = por %p114, %p115
      %p118 = scmp.ne.s32.totalorder %s101, %s117
      %p119 = scmp.eq.s32.totalorder %s21, 0
      %p120 = por %p118, %p119
      %p121 = scmp.le.s32.totalorder 1, %s15
      %p122 = scmp.lt.s32.totalorder %s15, 5
      %p123 = pnand %p121, %p122
      %p124 = pneg %p123
      // Predicated region
      $region9: #{tpu_custom_call.1} parent=5 // pred_check
        _
      $region10: #{tpu_custom_call.1} parent=5 // pred_check_branch
        %126 = sbr.rel (%p123) target = $region12
      $region11: #{tpu_custom_call.1} parent=5 // pred_region
        %s127 = ssub.s32 %s15, 1
      $region12: #{tpu_custom_call.1} parent=5 // pred_fallthru
        _
      %p128 = scmp.lt.s32.totalorder %s15, 4
      // Predicated region
      $region13: #{tpu_custom_call.1} parent=5 // pred_check
        %p129 = pneg %p128
      $region14: #{tpu_custom_call.1} parent=5 // pred_check_branch
        %131 = sbr.rel (%p129) target = $region16
      $region15: #{tpu_custom_call.1} parent=5 // pred_region
        // Predicated region
        $region17: #{tpu_custom_call.1} parent=15 // pred_check
          %p132 = pneg %p51
        $region18: #{tpu_custom_call.1} parent=15 // pred_check_branch
          %134 = sbr.rel (%p132) target = $region20
        $region19: #{tpu_custom_call.1} parent=15 // pred_region
          %s135 = sand.u32 %s41, 1
          %s136 = scalar_lea.sflag [#allocation4], %s135
          %s137 = sand.u32 %s41, 1
          %s138 = smul.addr %s137, 64
          %s139 = scalar_lea.vmem [#allocation3], %s138
          %s140 = smul.u32 %s22, 4
          %s141 = sadd.s32 %s140, %s23
          %s142 = smul.u32 4, %s141
          %s144 = ssub.s32 1024, 1024
          %145 = vsyncadd %s136, %s144
          %s146 = smul.addr %s142, 128
          %s147 = scalar_lea.hbm %s0, %s146
          %s148 = sshll.u32 %s139, 4
          %s149 = int_to_ptr.vmem [resolvable:$true] %s148
          %154 = dma.hbm_to_vmem [thread:$0]  %s147, 1024, %s149, %s136, 2048, 512, 32
        $region20: #{tpu_custom_call.1} parent=15 // pred_fallthru
          _
        // Predicated region
        $region21: #{tpu_custom_call.1} parent=15 // pred_check
          %p155 = pneg %p81
        $region22: #{tpu_custom_call.1} parent=15 // pred_check_branch
          %157 = sbr.rel (%p155) target = $region24
        $region23: #{tpu_custom_call.1} parent=15 // pred_region
          %s158 = sand.u32 %s71, 1
          %s159 = scalar_lea.sflag [#allocation7], %s158
          %s160 = sand.u32 %s71, 1
          %s161 = smul.addr %s160, 4
          %s162 = scalar_lea.vmem [#allocation6], %s161
          %s163 = smul.u32 %s22, 4
          %s164 = sadd.s32 %s163, %s23
          %s165 = smul.u32 4, %s164
          %s167 = ssub.s32 64, 64
          %168 = vsyncadd %s159, %s167
          %s169 = smul.addr %s165, 16
          %s170 = scalar_lea.hbm %s1, %s169
          %s172 = sshll.u32 %s162, 4
          %s173 = int_to_ptr.vmem [resolvable:$true] %s172
          %175 = dma.hbm_to_vmem [thread:$0]  %s170, 64, %s173, %s159
        $region24: #{tpu_custom_call.1} parent=15 // pred_fallthru
          _
      $region16: #{tpu_custom_call.1} parent=5 // pred_fallthru
        _
      %p176 = scmp.le.s32.totalorder 1, %s15
      %p177 = scmp.lt.s32.totalorder %s15, 5
      %p178 = pnand %p176, %p177
      %p179 = pneg %p178
      // Predicated region
      $region25: #{tpu_custom_call.1} parent=5 // pred_check
        _
      $region26: #{tpu_custom_call.1} parent=5 // pred_check_branch
        %181 = sbr.rel (%p178) target = $region28
      $region27: #{tpu_custom_call.1} parent=5 // pred_region
        %s182 = ssub.s32 %s15, 1
        %s183 = sand.u32 %s44, 1
        %s184 = scalar_lea.sflag [#allocation4], %s183
        %s185 = sand.u32 %s44, 1
        %s186 = smul.addr %s185, 64
        %s187 = scalar_lea.vmem [#allocation3], %s186
        // Predicated region
        $region29: #{tpu_custom_call.1} parent=27 // pred_check
          %p188 = pneg %p57
        $region30: #{tpu_custom_call.1} parent=27 // pred_check_branch
          %190 = sbr.rel (%p188) target = $region32
        $region31: #{tpu_custom_call.1} parent=27 // pred_region
          %191 = dma.done %s184, 1024
        $region32: #{tpu_custom_call.1} parent=27 // pred_fallthru
          _
        %s192 = sand.u32 %s74, 1
        %s193 = scalar_lea.sflag [#allocation7], %s192
        %s194 = sand.u32 %s74, 1
        %s195 = smul.addr %s194, 4
        %s196 = scalar_lea.vmem [#allocation6], %s195
        // Predicated region
        $region33: #{tpu_custom_call.1} parent=27 // pred_check
          %p197 = pneg %p87
        $region34: #{tpu_custom_call.1} parent=27 // pred_check_branch
          %199 = sbr.rel (%p197) target = $region36
        $region35: #{tpu_custom_call.1} parent=27 // pred_region
          %200 = dma.done %s193, 64
        $region36: #{tpu_custom_call.1} parent=27 // pred_fallthru
          _
        %s201 = sand.u32 %s44, 1
        %s202 = scalar_lea.sflag [#allocation4], %s201
        %s203 = sand.u32 %s44, 1
        %s204 = smul.addr %s203, 64
        %s205 = scalar_lea.vmem [#allocation3], %s204
        %p206 = pneg %p57
        %p207 = pneg %p54
        %s208 = sand.u32 %s74, 1
        %s209 = scalar_lea.sflag [#allocation7], %s208
        %s210 = sand.u32 %s74, 1
        %s211 = smul.addr %s210, 4
        %s212 = scalar_lea.vmem [#allocation6], %s211
        %p213 = pneg %p87
        %p214 = pneg %p84
        %p215 = pneg %p113
        %p216 = pneg %p110
        %s217 = smul.u32 %s24, 4
        %s218 = sadd.s32 %s217, %s25
        %s219 = smul.u32 4, %s218
        %s220 = smul.u32 %s24, 4
        %s221 = sadd.s32 %s220, %s25
        %s222 = smul.u32 4, %s221
        %p223 = scmp.eq.s32.totalorder %s25, 0
        // Predicated region
        $region37: #{tpu_custom_call.1} parent=27 // pred_check
          %p224 = pneg %p223
        $region38: #{tpu_custom_call.1} parent=27 // pred_check_branch
          %226 = sbr.rel (%p224) target = $region40
        $region39: #{tpu_custom_call.1} parent=27 // pred_region
          %v227 = vlaneseq
          %vm228 = vcmp.ge.s32.totalorder %v227, 0
          %vm229 = vcmp.lt.s32.totalorder %v227, 512
          %vm230 = vmand %vm228, %vm229
          %231 = vst.msk [vmem:[#allocation2] sm:$0xf] %vm230, 0.0
        $region40: #{tpu_custom_call.1} parent=27 // pred_fallthru
          _
        %v232 = vld [vmem:[%s187] sm:$0xff]
        %v233 = vld [vmem:[%s187 + $0x8] sm:$0xff]
        %v234 = vld [vmem:[%s187 + $0x10] sm:$0xff]
        %v235 = vld [vmem:[%s187 + $0x18] sm:$0xff]
        %v236 = vld [vmem:[%s187 + $0x20] sm:$0x3]
        %v237 = vld [vmem:[%s187 + $0x28] sm:$0x3]
        %v238 = vld [vmem:[%s187 + $0x30] sm:$0x3]
        %v239 = vld [vmem:[%s187 + $0x38] sm:$0x3]
        %v240 = vld [vmem:[%s196] sm:$0xf]
        %vm241 = vcmask 1041408
        %v242 = vsel %vm241, %v236, -inf
        %v243 = vmax.f32 %v232, %v242
        %v244 = vrot.slane %v243, 4
        %v245 = vmax.f32 %v243, %v244
        %v246 = vrot.slane %v245, 2
        %v247 = vmax.f32 %v245, %v246
        %v248 = vrot.slane %v247, 1
        %v249 = vmax.f32 %v247, %v248
        %v250 = vsel %vm241, %v237, -inf
        %v251 = vmax.f32 %v233, %v250
        %v252 = vrot.slane %v251, 4
        %v253 = vmax.f32 %v251, %v252
        %v254 = vrot.slane %v253, 2
        %v255 = vmax.f32 %v253, %v254
        %v256 = vrot.slane %v255, 1
        %v257 = vmax.f32 %v255, %v256
        %v258 = vsel %vm241, %v238, -inf
        %v259 = vmax.f32 %v234, %v258
        %v260 = vrot.slane %v259, 4
        %v261 = vmax.f32 %v259, %v260
        %v262 = vrot.slane %v261, 2
        %v263 = vmax.f32 %v261, %v262
        %v264 = vrot.slane %v263, 1
        %v265 = vmax.f32 %v263, %v264
        %v266 = vsel %vm241, %v239, -inf
        %v267 = vmax.f32 %v235, %v266
        %v268 = vrot.slane %v267, 4
        %v269 = vmax.f32 %v267, %v268
        %v270 = vrot.slane %v269, 2
        %v271 = vmax.f32 %v269, %v270
        %v272 = vrot.slane %v271, 1
        %v273 = vmax.f32 %v271, %v272
        %v274 = vsub.f32 %v232, %v249
        %v275 = vsub.f32 %v233, %v257
        %v276 = vsub.f32 %v234, %v265
        %v277 = vsub.f32 %v235, %v273
        %v278 = vsub.f32 %v236, %v249
        %v279 = vsub.f32 %v237, %v257
        %v280 = vsub.f32 %v238, %v265
        %v281 = vsub.f32 %v239, %v273
        %v282 = vmul.f32 %v274, 1.442695
        %v283 = vpow.pop %v282
        %v284 = vmul.f32 %v275, 1.442695
        %v285 = vpow.pop %v284
        %v286 = vmul.f32 %v276, 1.442695
        %v287 = vpow.pop %v286
        %v288 = vmul.f32 %v277, 1.442695
        %v289 = vpow.pop %v288
        %v290 = vmul.f32 %v278, 1.442695
        %v291 = vpow.pop %v290
        %v292 = vmul.f32 %v279, 1.442695
        %v293 = vpow.pop %v292
        %v294 = vmul.f32 %v280, 1.442695
        %v295 = vpow.pop %v294
        %v296 = vmul.f32 %v281, 1.442695
        %v297 = vpow.pop %v296
        %v298 = vsel %vm241, %v291, 0.0
        %v299 = vadd.f32 %v283, %v298
        %v300 = vrot.slane %v299, 4
        %v301 = vadd.f32 %v299, %v300
        %v302 = vrot.slane %v301, 2
        %v303 = vadd.f32 %v301, %v302
        %v304 = vrot.slane %v303, 1
        %v305 = vadd.f32 %v303, %v304
        %v306 = vsel %vm241, %v293, 0.0
        %v307 = vadd.f32 %v285, %v306
        %v308 = vrot.slane %v307, 4
        %v309 = vadd.f32 %v307, %v308
        %v310 = vrot.slane %v309, 2
        %v311 = vadd.f32 %v309, %v310
        %v312 = vrot.slane %v311, 1
        %v313 = vadd.f32 %v311, %v312
        %v314 = vsel %vm241, %v295, 0.0
        %v315 = vadd.f32 %v287, %v314
        %v316 = vrot.slane %v315, 4
        %v317 = vadd.f32 %v315, %v316
        %v318 = vrot.slane %v317, 2
        %v319 = vadd.f32 %v317, %v318
        %v320 = vrot.slane %v319, 1
        %v321 = vadd.f32 %v319, %v320
        %v322 = vsel %vm241, %v297, 0.0
        %v323 = vadd.f32 %v289, %v322
        %v324 = vrot.slane %v323, 4
        %v325 = vadd.f32 %v323, %v324
        %v326 = vrot.slane %v325, 2
        %v327 = vadd.f32 %v325, %v326
        %v328 = vrot.slane %v327, 1
        %v329 = vadd.f32 %v327, %v328
        %v330 = vlaneseq
        %v331 = vshrl.u32 %v330, 7
        %v332 = vadd.s32 %v331, 8
        %v333 = vlaneseq
        %v334 = vshrl.u32 %v333, 7
        %v335 = vsub.s32 0, %v334
        %v336 = vrot.slane %v240, %v335
        %v337 = vlaneseq
        %v338 = vshrl.u32 %v337, 7
        %v339 = vsub.s32 1, %v338
        %v340 = vrot.slane %v240, %v339
        %v341 = vlaneseq
        %v342 = vshrl.u32 %v341, 7
        %v343 = vsub.s32 2, %v342
        %v344 = vrot.slane %v240, %v343
        %v345 = vlaneseq
        %v346 = vshrl.u32 %v345, 7
        %v347 = vsub.s32 3, %v346
        %v348 = vrot.slane %v240, %v347
        %vm349 = vcmp.eq.s32.totalorder %v331, %v336
        %vm350 = vcmp.eq.s32.totalorder %v331, %v340
        %vm351 = vcmp.eq.s32.totalorder %v331, %v344
        %vm352 = vcmp.eq.s32.totalorder %v331, %v348
        %vm353 = vcmp.eq.s32.totalorder %v332, %v336
        %vm354 = vcmp.eq.s32.totalorder %v332, %v340
        %vm355 = vcmp.eq.s32.totalorder %v332, %v344
        %vm356 = vcmp.eq.s32.totalorder %v332, %v348
        %v357 = vsel %vm349, %v283, 0.0
        %v358 = vsel %vm350, %v285, 0.0
        %v359 = vsel %vm351, %v287, 0.0
        %v360 = vsel %vm352, %v289, 0.0
        %v361 = vsel %vm353, %v291, 0.0
        %v362 = vsel %vm354, %v293, 0.0
        %v363 = vsel %vm355, %v295, 0.0
        %v364 = vsel %vm356, %v297, 0.0
        %v365 = vsel %vm241, %v361, 0.0
        %v366 = vadd.f32 %v357, %v365
        %v367 = vrot.slane %v366, 4
        %v368 = vadd.f32 %v366, %v367
        %v369 = vrot.slane %v368, 2
        %v370 = vadd.f32 %v368, %v369
        %v371 = vrot.slane %v370, 1
        %v372 = vadd.f32 %v370, %v371
        %v373 = vsel %vm241, %v362, 0.0
        %v374 = vadd.f32 %v358, %v373
        %v375 = vrot.slane %v374, 4
        %v376 = vadd.f32 %v374, %v375
        %v377 = vrot.slane %v376, 2
        %v378 = vadd.f32 %v376, %v377
        %v379 = vrot.slane %v378, 1
        %v380 = vadd.f32 %v378, %v379
        %v381 = vsel %vm241, %v363, 0.0
        %v382 = vadd.f32 %v359, %v381
        %v383 = vrot.slane %v382, 4
        %v384 = vadd.f32 %v382, %v383
        %v385 = vrot.slane %v384, 2
        %v386 = vadd.f32 %v384, %v385
        %v387 = vrot.slane %v386, 1
        %v388 = vadd.f32 %v386, %v387
        %v389 = vsel %vm241, %v364, 0.0
        %v390 = vadd.f32 %v360, %v389
        %v391 = vrot.slane %v390, 4
        %v392 = vadd.f32 %v390, %v391
        %v393 = vrot.slane %v392, 2
        %v394 = vadd.f32 %v392, %v393
        %v395 = vrot.slane %v394, 1
        %v396 = vadd.f32 %v394, %v395
        %v397 = vrcp.pop %v305
        %v398 = vmul.f32 %v372, %v397
        %v399 = vrcp.pop %v313
        %v400 = vmul.f32 %v380, %v399
        %v401 = vrcp.pop %v321
        %v402 = vmul.f32 %v388, %v401
        %v403 = vrcp.pop %v329
        %v404 = vmul.f32 %v396, %v403
        %v405 = vadd.f32 %v398, 1e-08
        %v406 = vadd.f32 %v400, 1e-08
        %v407 = vadd.f32 %v402, 1e-08
        %v408 = vadd.f32 %v404, 1e-08
        %v409 = vrsqrt.pop %v405
        %v410 = vmul.f32 %v405, %v409
        %vm411 = vcmp.eq.f32.partialorder %v405, inf
        %v412 = vsel %vm411, %v405, %v410
        %vm413 = vcmp.eq.f32.partialorder %v405, 0.0
        %v414 = vand.u32 %v405, 2147483648
        %v415 = vsel %vm413, %v414, %v412
        %v416 = vrsqrt.pop %v406
        %v417 = vmul.f32 %v406, %v416
        %vm418 = vcmp.eq.f32.partialorder %v406, inf
        %v419 = vsel %vm418, %v406, %v417
        %vm420 = vcmp.eq.f32.partialorder %v406, 0.0
        %v421 = vand.u32 %v406, 2147483648
        %v422 = vsel %vm420, %v421, %v419
        %v423 = vrsqrt.pop %v407
        %v424 = vmul.f32 %v407, %v423
        %vm425 = vcmp.eq.f32.partialorder %v407, inf
        %v426 = vsel %vm425, %v407, %v424
        %vm427 = vcmp.eq.f32.partialorder %v407, 0.0
        %v428 = vand.u32 %v407, 2147483648
        %v429 = vsel %vm427, %v428, %v426
        %v430 = vrsqrt.pop %v408
        %v431 = vmul.f32 %v408, %v430
        %vm432 = vcmp.eq.f32.partialorder %v408, inf
        %v433 = vsel %vm432, %v408, %v431
        %vm434 = vcmp.eq.f32.partialorder %v408, 0.0
        %v435 = vand.u32 %v408, 2147483648
        %v436 = vsel %vm434, %v435, %v433
        %v437 = vadd.f32 %v415, 0.0009
        %v438 = vadd.f32 %v422, 0.0009
        %v439 = vadd.f32 %v429, 0.0009
        %v440 = vadd.f32 %v436, 0.0009
        %v441 = vsub.f32 1.0, %v437
        %v442 = vsub.f32 1.0, %v438
        %v443 = vsub.f32 1.0, %v439
        %v444 = vsub.f32 1.0, %v440
        %v445 = vsub.f32 1.0, %v398
        %v446 = vsub.f32 1.0, %v400
        %v447 = vsub.f32 1.0, %v402
        %v448 = vsub.f32 1.0, %v404
        %v449 = vmul.f32 %v445, %v445
        %v450 = vmul.f32 %v446, %v446
        %v451 = vmul.f32 %v447, %v447
        %v452 = vmul.f32 %v448, %v448
        %v453 = vmul.f32 %v449, %v441
        %v454 = vmul.f32 %v450, %v442
        %v455 = vmul.f32 %v451, %v443
        %v456 = vmul.f32 %v452, %v444
        %s457 = smul.u32 %s24, 4
        %s458 = sadd.s32 %s457, %s25
        %s459 = smul.u32 %s458, 512
        %s460 = sadd.s32 %s459, 512
        %p461 = scmp.le.s32.totalorder %s460, 2000
        // Predicated region
        $region41: #{tpu_custom_call.1} parent=27 // pred_check
          %p462 = pneg %p461
        $region42: #{tpu_custom_call.1} parent=27 // pred_check_branch
          %464 = sbr.rel (%p462) target = $region44
        $region43: #{tpu_custom_call.1} parent=27 // pred_region
          %v465 = vld [vmem:[#allocation2] sm:$0xf]
          %v470 = vcombine.low %v453, %v454
          %v471 = vcombine.low %v455, %v456
          %v473 = vunpack.c.l.s4 1966171168
          %v474 = vunpack.c.0.s8 %v473
          %v475 = vlaneseq
          %v476 = vshrl.u32 %v475, 7
          %v477 = vsub.s32 %v474, %v476
          %v478 = vrot.slane %v470, %v477
          %v480 = vunpack.c.l.s4 1966171168
          %v481 = vunpack.c.0.s8 %v480
          %v482 = vlaneseq
          %v483 = vshrl.u32 %v482, 7
          %v484 = vsub.s32 %v481, %v483
          %v485 = vrot.slane %v471, %v484
          %v486 = vcombine.low %v478, %v485
          %v488 = vunpack.c.l.s4 1966171168
          %v489 = vunpack.c.0.s8 %v488
          %v490 = vlaneseq
          %v491 = vshrl.u32 %v490, 7
          %v492 = vsub.s32 %v489, %v491
          %v493 = vrot.slane %v486, %v492
          %v495 = vadd.f32 %v465, %v493
          %v496 = vlaneseq
          %vm497 = vcmp.ge.s32.totalorder %v496, 0
          %vm498 = vcmp.lt.s32.totalorder %v496, 512
          %vm499 = vmand %vm497, %vm498
          %500 = vst.msk [vmem:[#allocation2] sm:$0xf] %vm499, %v495
        $region44: #{tpu_custom_call.1} parent=27 // pred_fallthru
          _
        %p501 = scmp.gt.s32.totalorder %s460, 2000
        // Predicated region
        $region45: #{tpu_custom_call.1} parent=27 // pred_check
          %p502 = pneg %p501
        $region46: #{tpu_custom_call.1} parent=27 // pred_check_branch
          %504 = sbr.rel (%p502) target = $region48
        $region47: #{tpu_custom_call.1} parent=27 // pred_region
          %v505 = vlaneseq
          %v506 = vand.u32 %v505, 127
          %v507 = vadd.s32 %v506, 128
          %v508 = vadd.s32 %v506, 256
          %v509 = vadd.s32 %v506, 384
          %v510 = vstv %s459
          %v511 = vadd.s32 %v510, %v506
          %v512 = vadd.s32 %v510, %v507
          %v513 = vadd.s32 %v510, %v508
          %v514 = vadd.s32 %v510, %v509
          %vm515 = vcmp.lt.s32.totalorder %v511, 2000
          %vm516 = vcmp.lt.s32.totalorder %v512, 2000
          %vm517 = vcmp.lt.s32.totalorder %v513, 2000
          %vm518 = vcmp.lt.s32.totalorder %v514, 2000
          %v519 = vsel %vm515, 1, 0
          %v520 = vsel %vm516, 1, 0
          %v521 = vsel %vm517, 1, 0
          %v522 = vsel %vm518, 1, 0
          %v523 = vcvt.s32.f32 %v519
          %v524 = vcvt.s32.f32 %v520
          %v525 = vcvt.s32.f32 %v521
          %v526 = vcvt.s32.f32 %v522
          %v527 = vld [vmem:[#allocation2] sm:$0xf]
          %v528 = vmul.f32 %v453, %v523
          %v529 = vmul.f32 %v454, %v524
          %v530 = vmul.f32 %v455, %v525
          %v531 = vmul.f32 %v456, %v526
          %v536 = vcombine.low %v528, %v529
          %v537 = vcombine.low %v530, %v531
          %v539 = vunpack.c.l.s4 1966171168
          %v540 = vunpack.c.0.s8 %v539
          %v541 = vlaneseq
          %v542 = vshrl.u32 %v541, 7
          %v543 = vsub.s32 %v540, %v542
          %v544 = vrot.slane %v536, %v543
          %v546 = vunpack.c.l.s4 1966171168
          %v547 = vunpack.c.0.s8 %v546
          %v548 = vlaneseq
          %v549 = vshrl.u32 %v548, 7
          %v550 = vsub.s32 %v547, %v549
          %v551 = vrot.slane %v537, %v550
          %v552 = vcombine.low %v544, %v551
          %v554 = vunpack.c.l.s4 1966171168
          %v555 = vunpack.c.0.s8 %v554
          %v556 = vlaneseq
          %v557 = vshrl.u32 %v556, 7
          %v558 = vsub.s32 %v555, %v557
          %v559 = vrot.slane %v552, %v558
          %v561 = vadd.f32 %v527, %v559
          %v562 = vlaneseq
          %vm563 = vcmp.ge.s32.totalorder %v562, 0
          %vm564 = vcmp.lt.s32.totalorder %v562, 512
          %vm565 = vmand %vm563, %vm564
          %566 = vst.msk [vmem:[#allocation2] sm:$0xf] %vm565, %v561
        $region48: #{tpu_custom_call.1} parent=27 // pred_fallthru
          _
        %p567 = scmp.eq.s32.totalorder %s25, 3
        // Predicated region
        $region49: #{tpu_custom_call.1} parent=27 // pred_check
          %p568 = pneg %p567
        $region50: #{tpu_custom_call.1} parent=27 // pred_check_branch
          %570 = sbr.rel (%p568) target = $region52
        $region51: #{tpu_custom_call.1} parent=27 // pred_region
          %v571 = vld [vmem:[#allocation2] sm:$0xf]
          %v573 = vlaneseq
          %v574 = vshrl.u32 %v573, 7
          %v575 = vsub.s32 0, %v574
          %v576 = vrot.slane %v571, %v575
          %v577 = vlaneseq
          %v578 = vshrl.u32 %v577, 7
          %v579 = vsub.s32 1, %v578
          %v580 = vrot.slane %v571, %v579
          %v581 = vlaneseq
          %v582 = vshrl.u32 %v581, 7
          %v583 = vsub.s32 2, %v582
          %v584 = vrot.slane %v571, %v583
          %v585 = vlaneseq
          %v586 = vshrl.u32 %v585, 7
          %v587 = vsub.s32 3, %v586
          %v588 = vrot.slane %v571, %v587
          %vm593 = vcmask 1040384
          %v594 = vsel %vm593, %v576, 0.0
          %v595 = vsel %vm593, %v580, 0.0
          %v596 = vadd.f32 %v594, %v595
          %v597 = vsel %vm593, %v584, 0.0
          %v598 = vadd.f32 %v596, %v597
          %v599 = vsel %vm593, %v588, 0.0
          %v600 = vadd.f32 %v598, %v599
          %601 = vadd.xlane.f32.xlu0 %v600
          %v602 = vpop.xlane.xlu0 %601
          %v603 = vrot.slane %v602, 4
          %v604 = vadd.f32 %v602, %v603
          %v605 = vrot.slane %v604, 2
          %v606 = vadd.f32 %v604, %v605
          %v607 = vrot.slane %v606, 1
          %v608 = vadd.f32 %v606, %v607
          %s609 = vtos %v608
          %v610 = vstv %s609
          %v611 = vrcp.pop 2000.0
          %v612 = vmul.f32 %v610, %v611
          %vm613 = vcmask 0
          %614 = vst.msk [vmem:[#allocation8] sm:$0x1] %vm613, %v612
        $region52: #{tpu_custom_call.1} parent=27 // pred_fallthru
          _
        // Predicated region
        $region53: #{tpu_custom_call.1} parent=27 // pred_check
          %p615 = pneg %p110
        $region54: #{tpu_custom_call.1} parent=27 // pred_check_branch
          %617 = sbr.rel (%p615) target = $region56
        $region55: #{tpu_custom_call.1} parent=27 // pred_region
          %s619 = ssub.s32 16, 16
          %620 = vsyncadd [#allocation5], %s619
          %s621 = smul.addr %s24, 16
          %s622 = scalar_lea.hbm %s2, %s621
          %s624 = sshll.u32 [#allocation8], 4
          %s625 = int_to_ptr.vmem [resolvable:$true] %s624
          %627 = dma.vmem_to_hbm [thread:$0]  %s625, 16, %s622, [#allocation5]
        $region56: #{tpu_custom_call.1} parent=27 // pred_fallthru
          _
        // Predicated region
        $region57: #{tpu_custom_call.1} parent=27 // pred_check
          %p628 = pneg %p110
        $region58: #{tpu_custom_call.1} parent=27 // pred_check_branch
          %630 = sbr.rel (%p628) target = $region60
        $region59: #{tpu_custom_call.1} parent=27 // pred_region
          %631 = dma.done [#allocation5], 16
        $region60: #{tpu_custom_call.1} parent=27 // pred_fallthru
          _
      $region28: #{tpu_custom_call.1} parent=5 // pred_fallthru
        _
      %p632 = scmp.le.s32.totalorder 2, %s15
      // Predicated region
      $region61: #{tpu_custom_call.1} parent=5 // pred_check
        %p633 = pneg %p632
      $region62: #{tpu_custom_call.1} parent=5 // pred_check_branch
        %635 = sbr.rel (%p633) target = $region64
      $region63: #{tpu_custom_call.1} parent=5 // pred_region
        %s636 = ssub.s32 %s15, 2
      $region64: #{tpu_custom_call.1} parent=5 // pred_fallthru
        _
    $region6: #{tpu_custom_call.1} parent=1 // loop_footer
      %s19 = sadd.s32 1, %s15
    $region7: #{tpu_custom_call.1} parent=1 // loop_footer_branch
      %14 = sbr.rel target = $region3
    $region8: #{tpu_custom_call.1} parent=1 // loop_exit
      _
    %637 = vsyncpa [#allocation4], 1
    %s638 = scalar_lea.sflag [#allocation4], 1
    %639 = vsyncpa %s638, 1
    %640 = vsyncpa [#allocation7], 1
    %s641 = scalar_lea.sflag [#allocation7], 1
    %642 = vsyncpa %s641, 1
    %643 = vsyncpa [#allocation5], 1
    %s644 = scalar_lea.sflag [#allocation5], 1
    %645 = vsyncpa %s644, 1

</llo_original>
